<compile_context>
chip_gen: v7x
topology: tpu7x:2x2x1
jax: 0.10.0
libtpu: 0.0.40
codegen_flags: <defaults>
</compile_context>

<pallas_src>
import functools

import jax
import jax.numpy as jnp
from jax.experimental import pallas as pl
from jax.experimental.pallas import tpu as pltpu


def _patches_kernel(x_ref, out_ref, *, C, nH, patch_size):
    """im2col permutation for a chunk of images.

    x_ref  : (bb, C*nH, p, nW, p) padded images, patch-row-major view.
             axis 1 is (c, i) merged row-major, axis 2 is r (row in patch),
             axis 3 is j (patch column), axis 4 is s (col in patch).
    out_ref: (bb, nH, nW, C*p*p) flattened patch vectors on the lane axis.

    out[b, i, j, c*p*p + r*p + s] = x[b, c*nH + i, r, j, s]
    """
    p = patch_size
    # C*p static slab slices, assembled once along the lane axis, stored once.
    slabs = []
    for c in range(C):
        for r in range(p):
            # (bb, nH, nW, p) slab for fixed (channel c, in-patch row r).
            slabs.append(x_ref[:, c * nH:(c + 1) * nH, r, :, :])
    # Lane order of the concatenation is (c, r, s) -> c*p*p + r*p + s, matching
    # the torch permute(0,2,3,1,4,5).reshape(...) flattening.
    out_ref[...] = jnp.concatenate(slabs, axis=-1)   # one dense full-tile store


def patches_forward(x, patch_size):
    B, C, H, W = x.shape
    p = patch_size
    Hp, Wp = H + 2, W + 2                      # F.pad(x, (1, 1, 1, 1))
    nH = (Hp - p) // p + 1                     # torch .unfold(dim, p, p) count
    nW = (Wp - p) // p + 1
    N = nH * nW
    Cpp = C * p * p

    # Halo pad + unfold remainder-crop + patch-row-major split in the wrapper,
    # so the kernel only slices and stores (no zero-fill, no shifted stores).
    xp = jnp.pad(x, ((0, 0), (0, 0), (1, 1), (1, 1)))
    xp = xp[:, :, :nH * p, :nW * p]
    xv = xp.reshape(B, C * nH, p, nW, p)       # (b, (c,i), r, j, s)

    # Batch folding: two fat steps when possible (maps to both v7x TCs while
    # amortising the per-step overhead on single-TC v5e/v6e), else per-image.
    n_steps = 2 if (B >= 2 and B % 2 == 0) else B
    bb = B // n_steps
    # VMEM per step stays in the hundreds-of-KiB range at DeepLense sizes;
    # re-check against v7x's ~32 MiB scoped default before scaling up crops.

    kernel = functools.partial(_patches_kernel, C=C, nH=nH, patch_size=p)

    out = pl.pallas_call(
        kernel,
        out_shape=jax.ShapeDtypeStruct((B, nH, nW, Cpp), x.dtype),
        grid_spec=pltpu.PrefetchScalarGridSpec(
            num_scalar_prefetch=0,
            grid=(n_steps,),
            in_specs=[pl.BlockSpec((bb, C * nH, p, nW, p),
                                   lambda b: (b, 0, 0, 0, 0))],
            out_specs=pl.BlockSpec((bb, nH, nW, Cpp),
                                   lambda b: (b, 0, 0, 0)),
        ),
        compiler_params=pltpu.CompilerParams(
            dimension_semantics=("parallel",)),   # 2 steps -> both v7x TCs
    )(xv)

    # (B, nH, nW, C*p*p) -> (B, N, C*p*p): tiny wrapper reshape (kept outside
    # the kernel because collapsing (nH, nW) onto the sublane axis in-kernel
    # would need a minor-dim reshape that Mosaic may not lower).
    return out.reshape(B, N, Cpp)


def patches_reference(x, patch_size):
    """Pure-JAX mirror of the torch module, for verification."""
    p = patch_size
    B, C, H, W = x.shape
    xp = jnp.pad(x, ((0, 0), (0, 0), (1, 1), (1, 1)))
    nH = (H + 2 - p) // p + 1
    nW = (W + 2 - p) // p + 1
    xp = xp[:, :, :nH * p, :nW * p]
    xp = xp.reshape(B, C, nH, p, nW, p)
    xp = jnp.transpose(xp, (0, 2, 4, 1, 3, 5))  # (B, nH, nW, C, p, p)
    return xp.reshape(B, nH * nW, C * p * p)


if __name__ == "__main__":
    key = jax.random.PRNGKey(0)
    B, C, H, W = 2, 4, 16, 16
    patch_size = 3                              # (16 + 2) % 3 == 0

    x = jax.random.normal(key, (B, C, H, W), dtype=jnp.float32)

    out = patches_forward(x, patch_size)
    out = jax.block_until_ready(out)

    ref = patches_reference(x, patch_size)
    assert out.shape == ref.shape == (B, 36, C * patch_size * patch_size)
    assert jnp.allclose(out, ref), "Pallas patches kernel mismatch vs reference"
    print("KERNEL_OK")
</pallas_src>

<mosaic_0001>
module attributes {stable_mosaic.version = 11 : i64} {
  func.func @_patches_kernel(%arg0: i32, %arg1: memref<1x24x3x6x3xf32, #tpu.memory_space<vmem>>, %arg2: memref<1x6x6x36xf32, #tpu.memory_space<vmem>>) attributes {dimension_semantics = [#tpu.dimension_semantics<parallel>], iteration_bounds = array<i64: 2>, scalar_prefetch = 0 : i64, scratch_operands = 0 : i64, tpu.core_type = #tpu.core_type<tc>, window_params = [{transform_indices = @transform_0, window_bounds = array<i64: 1, 24, 3, 6, 3>}, {transform_indices = @transform_1, window_bounds = array<i64: 1, 6, 6, 36>}]} {
    %c0 = arith.constant 0 : index
    %c0_0 = arith.constant 0 : index
    %c0_1 = arith.constant 0 : index
    %c0_2 = arith.constant 0 : index
    %c0_3 = arith.constant 0 : index
    %0 = vector.load %arg1[%c0, %c0_0, %c0_1, %c0_2, %c0_3] : memref<1x24x3x6x3xf32, #tpu.memory_space<vmem>>, vector<1x6x1x6x3xf32>
    %1 = vector.shape_cast %0 : vector<1x6x1x6x3xf32> to vector<1x6x6x3xf32>
    %c0_4 = arith.constant 0 : index
    %c0_5 = arith.constant 0 : index
    %c1 = arith.constant 1 : index
    %c0_6 = arith.constant 0 : index
    %c0_7 = arith.constant 0 : index
    %2 = vector.load %arg1[%c0_4, %c0_5, %c1, %c0_6, %c0_7] : memref<1x24x3x6x3xf32, #tpu.memory_space<vmem>>, vector<1x6x1x6x3xf32>
    %3 = vector.shape_cast %2 : vector<1x6x1x6x3xf32> to vector<1x6x6x3xf32>
    %c0_8 = arith.constant 0 : index
    %c0_9 = arith.constant 0 : index
    %c2 = arith.constant 2 : index
    %c0_10 = arith.constant 0 : index
    %c0_11 = arith.constant 0 : index
    %4 = vector.load %arg1[%c0_8, %c0_9, %c2, %c0_10, %c0_11] : memref<1x24x3x6x3xf32, #tpu.memory_space<vmem>>, vector<1x6x1x6x3xf32>
    %5 = vector.shape_cast %4 : vector<1x6x1x6x3xf32> to vector<1x6x6x3xf32>
    %c0_12 = arith.constant 0 : index
    %c6 = arith.constant 6 : index
    %c0_13 = arith.constant 0 : index
    %c0_14 = arith.constant 0 : index
    %c0_15 = arith.constant 0 : index
    %6 = vector.load %arg1[%c0_12, %c6, %c0_13, %c0_14, %c0_15] : memref<1x24x3x6x3xf32, #tpu.memory_space<vmem>>, vector<1x6x1x6x3xf32>
    %7 = vector.shape_cast %6 : vector<1x6x1x6x3xf32> to vector<1x6x6x3xf32>
    %c0_16 = arith.constant 0 : index
    %c6_17 = arith.constant 6 : index
    %c1_18 = arith.constant 1 : index
    %c0_19 = arith.constant 0 : index
    %c0_20 = arith.constant 0 : index
    %8 = vector.load %arg1[%c0_16, %c6_17, %c1_18, %c0_19, %c0_20] : memref<1x24x3x6x3xf32, #tpu.memory_space<vmem>>, vector<1x6x1x6x3xf32>
    %9 = vector.shape_cast %8 : vector<1x6x1x6x3xf32> to vector<1x6x6x3xf32>
    %c0_21 = arith.constant 0 : index
    %c6_22 = arith.constant 6 : index
    %c2_23 = arith.constant 2 : index
    %c0_24 = arith.constant 0 : index
    %c0_25 = arith.constant 0 : index
    %10 = vector.load %arg1[%c0_21, %c6_22, %c2_23, %c0_24, %c0_25] : memref<1x24x3x6x3xf32, #tpu.memory_space<vmem>>, vector<1x6x1x6x3xf32>
    %11 = vector.shape_cast %10 : vector<1x6x1x6x3xf32> to vector<1x6x6x3xf32>
    %c0_26 = arith.constant 0 : index
    %c12 = arith.constant 12 : index
    %c0_27 = arith.constant 0 : index
    %c0_28 = arith.constant 0 : index
    %c0_29 = arith.constant 0 : index
    %12 = vector.load %arg1[%c0_26, %c12, %c0_27, %c0_28, %c0_29] : memref<1x24x3x6x3xf32, #tpu.memory_space<vmem>>, vector<1x6x1x6x3xf32>
    %13 = vector.shape_cast %12 : vector<1x6x1x6x3xf32> to vector<1x6x6x3xf32>
    %c0_30 = arith.constant 0 : index
    %c12_31 = arith.constant 12 : index
    %c1_32 = arith.constant 1 : index
    %c0_33 = arith.constant 0 : index
    %c0_34 = arith.constant 0 : index
    %14 = vector.load %arg1[%c0_30, %c12_31, %c1_32, %c0_33, %c0_34] : memref<1x24x3x6x3xf32, #tpu.memory_space<vmem>>, vector<1x6x1x6x3xf32>
    %15 = vector.shape_cast %14 : vector<1x6x1x6x3xf32> to vector<1x6x6x3xf32>
    %c0_35 = arith.constant 0 : index
    %c12_36 = arith.constant 12 : index
    %c2_37 = arith.constant 2 : index
    %c0_38 = arith.constant 0 : index
    %c0_39 = arith.constant 0 : index
    %16 = vector.load %arg1[%c0_35, %c12_36, %c2_37, %c0_38, %c0_39] : memref<1x24x3x6x3xf32, #tpu.memory_space<vmem>>, vector<1x6x1x6x3xf32>
    %17 = vector.shape_cast %16 : vector<1x6x1x6x3xf32> to vector<1x6x6x3xf32>
    %c0_40 = arith.constant 0 : index
    %c18 = arith.constant 18 : index
    %c0_41 = arith.constant 0 : index
    %c0_42 = arith.constant 0 : index
    %c0_43 = arith.constant 0 : index
    %18 = vector.load %arg1[%c0_40, %c18, %c0_41, %c0_42, %c0_43] : memref<1x24x3x6x3xf32, #tpu.memory_space<vmem>>, vector<1x6x1x6x3xf32>
    %19 = vector.shape_cast %18 : vector<1x6x1x6x3xf32> to vector<1x6x6x3xf32>
    %c0_44 = arith.constant 0 : index
    %c18_45 = arith.constant 18 : index
    %c1_46 = arith.constant 1 : index
    %c0_47 = arith.constant 0 : index
    %c0_48 = arith.constant 0 : index
    %20 = vector.load %arg1[%c0_44, %c18_45, %c1_46, %c0_47, %c0_48] : memref<1x24x3x6x3xf32, #tpu.memory_space<vmem>>, vector<1x6x1x6x3xf32>
    %21 = vector.shape_cast %20 : vector<1x6x1x6x3xf32> to vector<1x6x6x3xf32>
    %c0_49 = arith.constant 0 : index
    %c18_50 = arith.constant 18 : index
    %c2_51 = arith.constant 2 : index
    %c0_52 = arith.constant 0 : index
    %c0_53 = arith.constant 0 : index
    %22 = vector.load %arg1[%c0_49, %c18_50, %c2_51, %c0_52, %c0_53] : memref<1x24x3x6x3xf32, #tpu.memory_space<vmem>>, vector<1x6x1x6x3xf32>
    %23 = vector.shape_cast %22 : vector<1x6x1x6x3xf32> to vector<1x6x6x3xf32>
    %24 = tpu.concatenate %1, %3, %5, %7, %9, %11, %13, %15, %17, %19, %21, %23 in 3 : vector<1x6x6x3xf32>, vector<1x6x6x3xf32>, vector<1x6x6x3xf32>, vector<1x6x6x3xf32>, vector<1x6x6x3xf32>, vector<1x6x6x3xf32>, vector<1x6x6x3xf32>, vector<1x6x6x3xf32>, vector<1x6x6x3xf32>, vector<1x6x6x3xf32>, vector<1x6x6x3xf32>, vector<1x6x6x3xf32> -> vector<1x6x6x36xf32>
    %c0_54 = arith.constant 0 : index
    %c0_55 = arith.constant 0 : index
    %c0_56 = arith.constant 0 : index
    %c0_57 = arith.constant 0 : index
    %25 = vector.load %arg2[%c0_54, %c0_55, %c0_56, %c0_57] : memref<1x6x6x36xf32, #tpu.memory_space<vmem>>, vector<1x6x6x36xf32>
    tpu.vector_store %arg2[%c0_54, %c0_55, %c0_56, %c0_57], %24 {strides = array<i32>} : memref<1x6x6x36xf32, #tpu.memory_space<vmem>>, vector<1x6x6x36xf32>,
    return
  }
  func.func @transform_0(%arg0: i32) -> (i32, i32, i32, i32, i32) {
    %c0_i32 = arith.constant 0 : i32
    %c0_i32_0 = arith.constant 0 : i32
    %c0_i32_1 = arith.constant 0 : i32
    %c0_i32_2 = arith.constant 0 : i32
    %c0_i32_3 = arith.constant 0 : i32
    return %arg0, %c0_i32, %c0_i32_0, %c0_i32_1, %c0_i32_2 : i32, i32, i32, i32, i32
  }
  func.func @transform_1(%arg0: i32) -> (i32, i32, i32, i32) {
    %c0_i32 = arith.constant 0 : i32
    %c0_i32_0 = arith.constant 0 : i32
    %c0_i32_1 = arith.constant 0 : i32
    %c0_i32_2 = arith.constant 0 : i32
    return %arg0, %c0_i32, %c0_i32_0, %c0_i32_1 : i32, i32, i32, i32
  }
}

</mosaic_0001>

<llo_original>
// kernel: tpu_custom_call.1
$region0: #{tpu_custom_call.1}
  #allocation0 [shape = 'u32[]', space=smem, size = 0x4, offset = 0x4, fixed_abs, tag = 'smem constant byte address 0x4 - core index']
  #allocation1 [shape = 'u32[144,128]{1,0:T(1,128)}', space=vmem, size = 0x12000, scoped, tag = 'internal scratch']
  %s0 = inlined_call_operand.vmem [shape: f32[2,24,3,6,3], index: 0, kind: input, shape index: {}]
  %s1 = inlined_call_operand.vmem [shape: f32[2,6,6,36], index: 1, kind: output, shape index: {}]
  %s2 = sld [smem:[#allocation0]]
  $region37: #{tpu_custom_call.1} parent=0
    _
  %s4 = ssub.s32 1, %s2
  %s5 = scalar_select 0, %s4, %s2
  loop: start=0, step=1, limit=4
  $region2: #{tpu_custom_call.1} parent=0 // loop_pre_header
    _
  $region3: #{tpu_custom_call.1} parent=0 // loop_header
    %s7 = sphi 0, %s11
    %p8 = scmp.ge.s32.totalorder %s7, 4
    %s17 = sphi 0, %s19
    %s20 = sphi 0, %s17
    %s21 = sphi 0, %s20
    %s37 = sphi 0, %s21
    %s43 = sphi 0, %s45
    %s46 = sphi 0, %s43
    %s47 = sphi 0, %s46
    %s63 = sphi 0, %s47
  $region4: #{tpu_custom_call.1} parent=0 // loop_header_branch
    %10 = sbr.rel (%p8) target = $region8
  $region5: #{tpu_custom_call.1} parent=0 // loop_body
    %s12 = ssub.s32 %s7, 1
    %s13 = ssub.s32 %s7, 2
    %s14 = sadd.s32 %s7, 1
    %s15 = ssub.s32 %s7, %s14
    %p16 = scmp.eq.s32.totalorder %s15, 0
    %s18 = sadd.s32 %s17, 1
    %s19 = scalar_select %p16, %s17, %s18
    %p22 = pneg %p16
    %p23 = scmp.eq.s32.totalorder %s7, 1
    %p24 = por %p22, %p23
    %p25 = scmp.ne.s32.totalorder %s17, %s20
    %p26 = scmp.eq.s32.totalorder %s7, 0
    %p27 = por %p25, %p26
    %p28 = scmp.ne.s32.totalorder %s17, %s20
    %p29 = scmp.eq.s32.totalorder %s12, 1
    %p30 = por %p28, %p29
    %p31 = scmp.ne.s32.totalorder %s20, %s21
    %p32 = scmp.eq.s32.totalorder %s12, 0
    %p33 = por %p31, %p32
    %p34 = scmp.ne.s32.totalorder %s20, %s21
    %p35 = scmp.eq.s32.totalorder %s13, 1
    %p36 = por %p34, %p35
    %p38 = scmp.ne.s32.totalorder %s21, %s37
    %p39 = scmp.eq.s32.totalorder %s13, 0
    %p40 = por %p38, %p39
    %s41 = ssub.s32 %s7, %s14
    %p42 = scmp.eq.s32.totalorder %s41, 0
    %s44 = sadd.s32 %s43, 1
    %s45 = scalar_select %p42, %s43, %s44
    %p48 = pneg %p42
    %p49 = scmp.eq.s32.totalorder %s7, 1
    %p50 = por %p48, %p49
    %p51 = scmp.ne.s32.totalorder %s43, %s46
    %p52 = scmp.eq.s32.totalorder %s7, 0
    %p53 = por %p51, %p52
    %p54 = scmp.ne.s32.totalorder %s43, %s46
    %p55 = scmp.eq.s32.totalorder %s12, 1
    %p56 = por %p54, %p55
    %p57 = scmp.ne.s32.totalorder %s46, %s47
    %p58 = scmp.eq.s32.totalorder %s12, 0
    %p59 = por %p57, %p58
    %p60 = scmp.ne.s32.totalorder %s46, %s47
    %p61 = scmp.eq.s32.totalorder %s13, 1
    %p62 = por %p60, %p61
    %p64 = scmp.ne.s32.totalorder %s47, %s63
    %p65 = scmp.eq.s32.totalorder %s13, 0
    %p66 = por %p64, %p65
    %p67 = scmp.le.s32.totalorder 1, %s7
    %p68 = scmp.lt.s32.totalorder %s7, 3
    %p69 = pnand %p67, %p68
    %p70 = pneg %p69
    // Predicated region
    $region9: #{tpu_custom_call.1} parent=5 // pred_check
      _
    $region10: #{tpu_custom_call.1} parent=5 // pred_check_branch
      %72 = sbr.rel (%p69) target = $region12
    $region11: #{tpu_custom_call.1} parent=5 // pred_region
      %s73 = ssub.s32 %s7, 1
    $region12: #{tpu_custom_call.1} parent=5 // pred_fallthru
      _
    %p74 = scmp.lt.s32.totalorder %s7, 2
    // Predicated region
    $region13: #{tpu_custom_call.1} parent=5 // pred_check
      %p75 = pneg %p74
    $region14: #{tpu_custom_call.1} parent=5 // pred_check_branch
      %77 = sbr.rel (%p75) target = $region16
    $region15: #{tpu_custom_call.1} parent=5 // pred_region
      // Predicated region
      $region17: #{tpu_custom_call.1} parent=15 // pred_check
        %p78 = pneg %p27
      $region18: #{tpu_custom_call.1} parent=15 // pred_check_branch
        %80 = sbr.rel (%p78) target = $region20
      $region19: #{tpu_custom_call.1} parent=15 // pred_region
        %p81 = scmp.lt.s32.totalorder %s7, 1
        %s82 = scalar_select %p81, %s7, 1
        %s83 = smul.addr %s82, 72
        %s84 = smul.addr %s83, 8
        %s85 = scalar_lea.vmem %s0, %s84
      $region20: #{tpu_custom_call.1} parent=15 // pred_fallthru
        _
    $region16: #{tpu_custom_call.1} parent=5 // pred_fallthru
      _
    %p86 = scmp.le.s32.totalorder 1, %s7
    %p87 = scmp.lt.s32.totalorder %s7, 3
    %p88 = pnand %p86, %p87
    %p89 = pneg %p88
    // Predicated region
    $region21: #{tpu_custom_call.1} parent=5 // pred_check
      _
    $region22: #{tpu_custom_call.1} parent=5 // pred_check_branch
      %91 = sbr.rel (%p88) target = $region24
    $region23: #{tpu_custom_call.1} parent=5 // pred_region
      %s92 = ssub.s32 %s7, 1
      %p93 = scmp.lt.s32.totalorder %s12, 1
      %s94 = scalar_select %p93, %s12, 1
      %s95 = smul.addr %s94, 72
      %s96 = smul.addr %s95, 8
      %s97 = scalar_lea.vmem %s0, %s96
      %p98 = pneg %p33
      %p99 = pneg %p30
      %p100 = pneg %p59
      %p101 = pneg %p56
      %p102 = scmp.lt.s32.totalorder %s12, 1
      %s103 = scalar_select %p102, %s12, 1
      %s104 = smul.addr %s103, 6
      %s105 = smul.addr %s104, 8
      %s106 = scalar_lea.vmem %s1, %s105
      %p107 = scmp.lt.s32.totalorder %s12, 1
      %s108 = scalar_select %p107, %s12, 1
      %s109 = smul.addr %s108, 72
      %s110 = smul.addr %s109, 8
      %s111 = scalar_lea.vmem %s0, %s110
      %p112 = scmp.lt.s32.totalorder %s12, 1
      %s113 = scalar_select %p112, %s12, 1
      %s114 = smul.addr %s113, 6
      %s115 = smul.addr %s114, 8
      %s116 = scalar_lea.vmem %s1, %s115
      %v117 = vld [vmem:[%s111] sm:$0x3f]
      %v118 = vld [vmem:[%s111 + $0x18] sm:$0x3f]
      %v119 = vld [vmem:[%s111 + $0x30] sm:$0x3f]
      %v120 = vld [vmem:[%s111 + $0x48] sm:$0x3f]
      %v121 = vld [vmem:[%s111 + $0x60] sm:$0x3f]
      %v122 = vld [vmem:[%s111 + $0x78] sm:$0x3f]
      %s123 = scalar_lea.vmem %s111, 8
      %v124 = vld [vmem:[%s123] sm:$0x3f]
      %v125 = vld [vmem:[%s123 + $0x18] sm:$0x3f]
      %v126 = vld [vmem:[%s123 + $0x30] sm:$0x3f]
      %v127 = vld [vmem:[%s123 + $0x48] sm:$0x3f]
      %v128 = vld [vmem:[%s123 + $0x60] sm:$0x3f]
      %v129 = vld [vmem:[%s123 + $0x78] sm:$0x3f]
      %s130 = scalar_lea.vmem %s111, 16
      %v131 = vld [vmem:[%s130] sm:$0x3f]
      %v132 = vld [vmem:[%s130 + $0x18] sm:$0x3f]
      %v133 = vld [vmem:[%s130 + $0x30] sm:$0x3f]
      %v134 = vld [vmem:[%s130 + $0x48] sm:$0x3f]
      %v135 = vld [vmem:[%s130 + $0x60] sm:$0x3f]
      %v136 = vld [vmem:[%s130 + $0x78] sm:$0x3f]
      %s137 = scalar_lea.vmem %s111, 144
      %v138 = vld [vmem:[%s137] sm:$0x3f]
      %v139 = vld [vmem:[%s137 + $0x18] sm:$0x3f]
      %v140 = vld [vmem:[%s137 + $0x30] sm:$0x3f]
      %v141 = vld [vmem:[%s137 + $0x48] sm:$0x3f]
      %v142 = vld [vmem:[%s137 + $0x60] sm:$0x3f]
      %v143 = vld [vmem:[%s137 + $0x78] sm:$0x3f]
      %s144 = scalar_lea.vmem %s111, 152
      %v145 = vld [vmem:[%s144] sm:$0x3f]
      %v146 = vld [vmem:[%s144 + $0x18] sm:$0x3f]
      %v147 = vld [vmem:[%s144 + $0x30] sm:$0x3f]
      %v148 = vld [vmem:[%s144 + $0x48] sm:$0x3f]
      %v149 = vld [vmem:[%s144 + $0x60] sm:$0x3f]
      %v150 = vld [vmem:[%s144 + $0x78] sm:$0x3f]
      %s151 = scalar_lea.vmem %s111, 160
      %v152 = vld [vmem:[%s151] sm:$0x3f]
      %v153 = vld [vmem:[%s151 + $0x18] sm:$0x3f]
      %v154 = vld [vmem:[%s151 + $0x30] sm:$0x3f]
      %v155 = vld [vmem:[%s151 + $0x48] sm:$0x3f]
      %v156 = vld [vmem:[%s151 + $0x60] sm:$0x3f]
      %v157 = vld [vmem:[%s151 + $0x78] sm:$0x3f]
      %s158 = scalar_lea.vmem %s111, 288
      %v159 = vld [vmem:[%s158] sm:$0x3f]
      %v160 = vld [vmem:[%s158 + $0x18] sm:$0x3f]
      %v161 = vld [vmem:[%s158 + $0x30] sm:$0x3f]
      %v162 = vld [vmem:[%s158 + $0x48] sm:$0x3f]
      %v163 = vld [vmem:[%s158 + $0x60] sm:$0x3f]
      %v164 = vld [vmem:[%s158 + $0x78] sm:$0x3f]
      %s165 = scalar_lea.vmem %s111, 296
      %v166 = vld [vmem:[%s165] sm:$0x3f]
      %v167 = vld [vmem:[%s165 + $0x18] sm:$0x3f]
      %v168 = vld [vmem:[%s165 + $0x30] sm:$0x3f]
      %v169 = vld [vmem:[%s165 + $0x48] sm:$0x3f]
      %v170 = vld [vmem:[%s165 + $0x60] sm:$0x3f]
      %v171 = vld [vmem:[%s165 + $0x78] sm:$0x3f]
      %s172 = scalar_lea.vmem %s111, 304
      %v173 = vld [vmem:[%s172] sm:$0x3f]
      %v174 = vld [vmem:[%s172 + $0x18] sm:$0x3f]
      %v175 = vld [vmem:[%s172 + $0x30] sm:$0x3f]
      %v176 = vld [vmem:[%s172 + $0x48] sm:$0x3f]
      %v177 = vld [vmem:[%s172 + $0x60] sm:$0x3f]
      %v178 = vld [vmem:[%s172 + $0x78] sm:$0x3f]
      %s179 = scalar_lea.vmem %s111, 432
      %v180 = vld [vmem:[%s179] sm:$0x3f]
      %v181 = vld [vmem:[%s179 + $0x18] sm:$0x3f]
      %v182 = vld [vmem:[%s179 + $0x30] sm:$0x3f]
      %v183 = vld [vmem:[%s179 + $0x48] sm:$0x3f]
      %v184 = vld [vmem:[%s179 + $0x60] sm:$0x3f]
      %v185 = vld [vmem:[%s179 + $0x78] sm:$0x3f]
      %s186 = scalar_lea.vmem %s111, 440
      %v187 = vld [vmem:[%s186] sm:$0x3f]
      %v188 = vld [vmem:[%s186 + $0x18] sm:$0x3f]
      %v189 = vld [vmem:[%s186 + $0x30] sm:$0x3f]
      %v190 = vld [vmem:[%s186 + $0x48] sm:$0x3f]
      %v191 = vld [vmem:[%s186 + $0x60] sm:$0x3f]
      %v192 = vld [vmem:[%s186 + $0x78] sm:$0x3f]
      %s193 = scalar_lea.vmem %s111, 448
      %v194 = vld [vmem:[%s193] sm:$0x3f]
      %v195 = vld [vmem:[%s193 + $0x18] sm:$0x3f]
      %v196 = vld [vmem:[%s193 + $0x30] sm:$0x3f]
      %v197 = vld [vmem:[%s193 + $0x48] sm:$0x3f]
      %v198 = vld [vmem:[%s193 + $0x60] sm:$0x3f]
      %v199 = vld [vmem:[%s193 + $0x78] sm:$0x3f]
      %206 = vrot.lane.b32.xlu0 %v124, 3
      %v207 = vpop.permute.xlu0 %206
      %208 = vrot.lane.b32.xlu0 %v125, 3
      %v209 = vpop.permute.xlu0 %208
      %210 = vrot.lane.b32.xlu0 %v126, 3
      %v211 = vpop.permute.xlu0 %210
      %212 = vrot.lane.b32.xlu0 %v127, 3
      %v213 = vpop.permute.xlu0 %212
      %214 = vrot.lane.b32.xlu0 %v128, 3
      %v215 = vpop.permute.xlu0 %214
      %216 = vrot.lane.b32.xlu0 %v129, 3
      %v217 = vpop.permute.xlu0 %216
      %230 = vrot.lane.b32.xlu0 %v131, 6
      %v231 = vpop.permute.xlu0 %230
      %232 = vrot.lane.b32.xlu0 %v132, 6
      %v233 = vpop.permute.xlu0 %232
      %234 = vrot.lane.b32.xlu0 %v133, 6
      %v235 = vpop.permute.xlu0 %234
      %236 = vrot.lane.b32.xlu0 %v134, 6
      %v237 = vpop.permute.xlu0 %236
      %238 = vrot.lane.b32.xlu0 %v135, 6
      %v239 = vpop.permute.xlu0 %238
      %240 = vrot.lane.b32.xlu0 %v136, 6
      %v241 = vpop.permute.xlu0 %240
      %254 = vrot.lane.b32.xlu0 %v138, 9
      %v255 = vpop.permute.xlu0 %254
      %256 = vrot.lane.b32.xlu0 %v139, 9
      %v257 = vpop.permute.xlu0 %256
      %258 = vrot.lane.b32.xlu0 %v140, 9
      %v259 = vpop.permute.xlu0 %258
      %260 = vrot.lane.b32.xlu0 %v141, 9
      %v261 = vpop.permute.xlu0 %260
      %262 = vrot.lane.b32.xlu0 %v142, 9
      %v263 = vpop.permute.xlu0 %262
      %264 = vrot.lane.b32.xlu0 %v143, 9
      %v265 = vpop.permute.xlu0 %264
      %278 = vrot.lane.b32.xlu0 %v145, 12
      %v279 = vpop.permute.xlu0 %278
      %280 = vrot.lane.b32.xlu0 %v146, 12
      %v281 = vpop.permute.xlu0 %280
      %282 = vrot.lane.b32.xlu0 %v147, 12
      %v283 = vpop.permute.xlu0 %282
      %284 = vrot.lane.b32.xlu0 %v148, 12
      %v285 = vpop.permute.xlu0 %284
      %286 = vrot.lane.b32.xlu0 %v149, 12
      %v287 = vpop.permute.xlu0 %286
      %288 = vrot.lane.b32.xlu0 %v150, 12
      %v289 = vpop.permute.xlu0 %288
      %302 = vrot.lane.b32.xlu0 %v152, 15
      %v303 = vpop.permute.xlu0 %302
      %304 = vrot.lane.b32.xlu0 %v153, 15
      %v305 = vpop.permute.xlu0 %304
      %306 = vrot.lane.b32.xlu0 %v154, 15
      %v307 = vpop.permute.xlu0 %306
      %308 = vrot.lane.b32.xlu0 %v155, 15
      %v309 = vpop.permute.xlu0 %308
      %310 = vrot.lane.b32.xlu0 %v156, 15
      %v311 = vpop.permute.xlu0 %310
      %312 = vrot.lane.b32.xlu0 %v157, 15
      %v313 = vpop.permute.xlu0 %312
      %326 = vrot.lane.b32.xlu0 %v159, 18
      %v327 = vpop.permute.xlu0 %326
      %328 = vrot.lane.b32.xlu0 %v160, 18
      %v329 = vpop.permute.xlu0 %328
      %330 = vrot.lane.b32.xlu0 %v161, 18
      %v331 = vpop.permute.xlu0 %330
      %332 = vrot.lane.b32.xlu0 %v162, 18
      %v333 = vpop.permute.xlu0 %332
      %334 = vrot.lane.b32.xlu0 %v163, 18
      %v335 = vpop.permute.xlu0 %334
      %336 = vrot.lane.b32.xlu0 %v164, 18
      %v337 = vpop.permute.xlu0 %336
      %350 = vrot.lane.b32.xlu0 %v166, 21
      %v351 = vpop.permute.xlu0 %350
      %352 = vrot.lane.b32.xlu0 %v167, 21
      %v353 = vpop.permute.xlu0 %352
      %354 = vrot.lane.b32.xlu0 %v168, 21
      %v355 = vpop.permute.xlu0 %354
      %356 = vrot.lane.b32.xlu0 %v169, 21
      %v357 = vpop.permute.xlu0 %356
      %358 = vrot.lane.b32.xlu0 %v170, 21
      %v359 = vpop.permute.xlu0 %358
      %360 = vrot.lane.b32.xlu0 %v171, 21
      %v361 = vpop.permute.xlu0 %360
      %374 = vrot.lane.b32.xlu0 %v173, 24
      %v375 = vpop.permute.xlu0 %374
      %376 = vrot.lane.b32.xlu0 %v174, 24
      %v377 = vpop.permute.xlu0 %376
      %378 = vrot.lane.b32.xlu0 %v175, 24
      %v379 = vpop.permute.xlu0 %378
      %380 = vrot.lane.b32.xlu0 %v176, 24
      %v381 = vpop.permute.xlu0 %380
      %382 = vrot.lane.b32.xlu0 %v177, 24
      %v383 = vpop.permute.xlu0 %382
      %384 = vrot.lane.b32.xlu0 %v178, 24
      %v385 = vpop.permute.xlu0 %384
      %398 = vrot.lane.b32.xlu0 %v180, 27
      %v399 = vpop.permute.xlu0 %398
      %400 = vrot.lane.b32.xlu0 %v181, 27
      %v401 = vpop.permute.xlu0 %400
      %402 = vrot.lane.b32.xlu0 %v182, 27
      %v403 = vpop.permute.xlu0 %402
      %404 = vrot.lane.b32.xlu0 %v183, 27
      %v405 = vpop.permute.xlu0 %404
      %406 = vrot.lane.b32.xlu0 %v184, 27
      %v407 = vpop.permute.xlu0 %406
      %408 = vrot.lane.b32.xlu0 %v185, 27
      %v409 = vpop.permute.xlu0 %408
      %422 = vrot.lane.b32.xlu0 %v187, 30
      %v423 = vpop.permute.xlu0 %422
      %424 = vrot.lane.b32.xlu0 %v188, 30
      %v425 = vpop.permute.xlu0 %424
      %426 = vrot.lane.b32.xlu0 %v189, 30
      %v427 = vpop.permute.xlu0 %426
      %428 = vrot.lane.b32.xlu0 %v190, 30
      %v429 = vpop.permute.xlu0 %428
      %430 = vrot.lane.b32.xlu0 %v191, 30
      %v431 = vpop.permute.xlu0 %430
      %432 = vrot.lane.b32.xlu0 %v192, 30
      %v433 = vpop.permute.xlu0 %432
      %446 = vrot.lane.b32.xlu0 %v194, 33
      %v447 = vpop.permute.xlu0 %446
      %448 = vrot.lane.b32.xlu0 %v195, 33
      %v449 = vpop.permute.xlu0 %448
      %450 = vrot.lane.b32.xlu0 %v196, 33
      %v451 = vpop.permute.xlu0 %450
      %452 = vrot.lane.b32.xlu0 %v197, 33
      %v453 = vpop.permute.xlu0 %452
      %454 = vrot.lane.b32.xlu0 %v198, 33
      %v455 = vpop.permute.xlu0 %454
      %456 = vrot.lane.b32.xlu0 %v199, 33
      %v457 = vpop.permute.xlu0 %456
      %vm464 = vcmask 23552
      %v465 = vsel %vm464, %v117, %v207
      %v466 = vsel %vm464, %v118, %v209
      %v467 = vsel %vm464, %v119, %v211
      %v468 = vsel %vm464, %v120, %v213
      %v469 = vsel %vm464, %v121, %v215
      %v470 = vsel %vm464, %v122, %v217
      %vm471 = vcmask 48128
      %v472 = vsel %vm471, %v465, %v231
      %v473 = vsel %vm471, %v466, %v233
      %v474 = vsel %vm471, %v467, %v235
      %v475 = vsel %vm471, %v468, %v237
      %v476 = vsel %vm471, %v469, %v239
      %v477 = vsel %vm471, %v470, %v241
      %vm478 = vcmask 72704
      %v479 = vsel %vm478, %v472, %v255
      %v480 = vsel %vm478, %v473, %v257
      %v481 = vsel %vm478, %v474, %v259
      %v482 = vsel %vm478, %v475, %v261
      %v483 = vsel %vm478, %v476, %v263
      %v484 = vsel %vm478, %v477, %v265
      %vm485 = vcmask 97280
      %v486 = vsel %vm485, %v479, %v279
      %v487 = vsel %vm485, %v480, %v281
      %v488 = vsel %vm485, %v481, %v283
      %v489 = vsel %vm485, %v482, %v285
      %v490 = vsel %vm485, %v483, %v287
      %v491 = vsel %vm485, %v484, %v289
      %vm492 = vcmask 121856
      %v493 = vsel %vm492, %v486, %v303
      %v494 = vsel %vm492, %v487, %v305
      %v495 = vsel %vm492, %v488, %v307
      %v496 = vsel %vm492, %v489, %v309
      %v497 = vsel %vm492, %v490, %v311
      %v498 = vsel %vm492, %v491, %v313
      %vm499 = vcmask 146432
      %v500 = vsel %vm499, %v493, %v327
      %v501 = vsel %vm499, %v494, %v329
      %v502 = vsel %vm499, %v495, %v331
      %v503 = vsel %vm499, %v496, %v333
      %v504 = vsel %vm499, %v497, %v335
      %v505 = vsel %vm499, %v498, %v337
      %vm506 = vcmask 171008
      %v507 = vsel %vm506, %v500, %v351
      %v508 = vsel %vm506, %v501, %v353
      %v509 = vsel %vm506, %v502, %v355
      %v510 = vsel %vm506, %v503, %v357
      %v511 = vsel %vm506, %v504, %v359
      %v512 = vsel %vm506, %v505, %v361
      %vm513 = vcmask 195584
      %v514 = vsel %vm513, %v507, %v375
      %v515 = vsel %vm513, %v508, %v377
      %v516 = vsel %vm513, %v509, %v379
      %v517 = vsel %vm513, %v510, %v381
      %v518 = vsel %vm513, %v511, %v383
      %v519 = vsel %vm513, %v512, %v385
      %vm520 = vcmask 220160
      %v521 = vsel %vm520, %v514, %v399
      %v522 = vsel %vm520, %v515, %v401
      %v523 = vsel %vm520, %v516, %v403
      %v524 = vsel %vm520, %v517, %v405
      %v525 = vsel %vm520, %v518, %v407
      %v526 = vsel %vm520, %v519, %v409
      %vm527 = vcmask 244736
      %v528 = vsel %vm527, %v521, %v423
      %v529 = vsel %vm527, %v522, %v425
      %v530 = vsel %vm527, %v523, %v427
      %v531 = vsel %vm527, %v524, %v429
      %v532 = vsel %vm527, %v525, %v431
      %v533 = vsel %vm527, %v526, %v433
      %vm534 = vcmask 269312
      %v535 = vsel %vm534, %v528, %v447
      %v536 = vsel %vm534, %v529, %v449
      %v537 = vsel %vm534, %v530, %v451
      %v538 = vsel %vm534, %v531, %v453
      %v539 = vsel %vm534, %v532, %v455
      %v540 = vsel %vm534, %v533, %v457
      %vm541 = vcmask 291840
      %542 = vst.msk [vmem:[%s116] sm:$0x3f] %vm541, %v535
      %543 = vst.msk [vmem:[%s116 + $0x8] sm:$0x3f] %vm541, %v536
      %544 = vst.msk [vmem:[%s116 + $0x10] sm:$0x3f] %vm541, %v537
      %545 = vst.msk [vmem:[%s116 + $0x18] sm:$0x3f] %vm541, %v538
      %546 = vst.msk [vmem:[%s116 + $0x20] sm:$0x3f] %vm541, %v539
      %547 = vst.msk [vmem:[%s116 + $0x28] sm:$0x3f] %vm541, %v540
      %p548 = scmp.lt.s32.totalorder %s12, 1
      %s549 = scalar_select %p548, %s12, 1
      %s550 = smul.addr %s549, 6
      %s551 = smul.addr %s550, 8
      %s552 = scalar_lea.vmem %s1, %s551
      // Predicated region
      $region25: #{tpu_custom_call.1} parent=23 // pred_check
        %p553 = pneg %p56
      $region26: #{tpu_custom_call.1} parent=23 // pred_check_branch
        %555 = sbr.rel (%p553) target = $region28
      $region27: #{tpu_custom_call.1} parent=23 // pred_region
        _
      $region28: #{tpu_custom_call.1} parent=23 // pred_fallthru
        _
    $region24: #{tpu_custom_call.1} parent=5 // pred_fallthru
      _
    %p556 = scmp.le.s32.totalorder 2, %s7
    // Predicated region
    $region29: #{tpu_custom_call.1} parent=5 // pred_check
      %p557 = pneg %p556
    $region30: #{tpu_custom_call.1} parent=5 // pred_check_branch
      %559 = sbr.rel (%p557) target = $region32
    $region31: #{tpu_custom_call.1} parent=5 // pred_region
      %s560 = ssub.s32 %s7, 2
      // Predicated region
      $region33: #{tpu_custom_call.1} parent=31 // pred_check
        %p561 = pneg %p62
      $region34: #{tpu_custom_call.1} parent=31 // pred_check_branch
        %563 = sbr.rel (%p561) target = $region36
      $region35: #{tpu_custom_call.1} parent=31 // pred_region
        %p564 = scmp.lt.s32.totalorder %s13, 1
        %s565 = scalar_select %p564, %s13, 1
        %s566 = smul.addr %s565, 6
        %s567 = smul.addr %s566, 8
        %s568 = scalar_lea.vmem %s1, %s567
      $region36: #{tpu_custom_call.1} parent=31 // pred_fallthru
        _
    $region32: #{tpu_custom_call.1} parent=5 // pred_fallthru
      _
  $region6: #{tpu_custom_call.1} parent=0 // loop_footer
    %s11 = sadd.s32 1, %s7
  $region7: #{tpu_custom_call.1} parent=0 // loop_footer_branch
    %6 = sbr.rel target = $region3
  $region8: #{tpu_custom_call.1} parent=0 // loop_exit
    _

</llo_original>
